<compile_context>
chip_gen: v7x
topology: tpu7x:2x2x1
jax: 0.10.0
libtpu: 0.0.40
codegen_flags: <defaults>
</compile_context>

<pallas_src>
import functools

import jax
import jax.numpy as jnp
from jax.experimental import pallas as pl
from jax.experimental.pallas import tpu as pltpu


def dnet2_kernel(logits_ref, targets_ref, scale_ref, w_a_ref, w_b_ref, b_ref,
                 hid_w_ref, hid_b_ref, out_ref, *, p_pad):
    """One batch tile of the D_net2 forward (equality_of_odds=True)."""
    logits = logits_ref[...].astype(jnp.float32)      # (TB, D)
    targets = targets_ref[...].astype(jnp.float32)    # (TB, D)

    # s = sigmoid((1 + |c|) * logits); scale precomputed host-side.
    s = jax.nn.sigmoid(scale_ref[...] * logits)        # (TB, D)
    st = s * targets                                   # (TB, D)

    # Folded first layer: z1 = s @ (W0+W2) + (s*t) @ (W1-W2) + b   (no concat).
    z1 = (jnp.dot(s, w_a_ref[...], preferred_element_type=jnp.float32)
          + jnp.dot(st, w_b_ref[...], preferred_element_type=jnp.float32)
          + b_ref[...])                                # (TB, H_pad)

    # hidden Linear(H -> P): z1 @ W.T + b  (hid_w stored pre-transposed & padded).
    z2 = (jnp.dot(z1, hid_w_ref[...], preferred_element_type=jnp.float32)
          + hid_b_ref[...])                            # (TB, P_pad)

    # Single lane-dense output slab: [z2 | sigmoid(z2)], both 128-aligned.
    out_ref[:, :p_pad] = z2
    out_ref[:, p_pad:] = jax.nn.sigmoid(z2)


def init_params(key, input_dim, protected_dim, hidden_nodes=10, no_targets=3):
    """Deterministic parameter init matching the shapes in D_net2.__init__."""
    k_w2, k_hw, k_hb = jax.random.split(key, 3)
    c = jnp.ones((protected_dim,), jnp.float32)
    fan_in, fan_out = no_targets * input_dim, hidden_nodes
    bound = (6.0 / (fan_in + fan_out)) ** 0.5
    w2 = jax.random.uniform(k_w2, (fan_in, fan_out), jnp.float32, -bound, bound)
    b = jnp.zeros((hidden_nodes,), jnp.float32)
    lin_bound = 1.0 / (hidden_nodes ** 0.5)
    # hidden = Linear(hidden_nodes, protected_dim); stored transposed (H, P).
    hid_w = jax.random.uniform(k_hw, (hidden_nodes, protected_dim), jnp.float32,
                               -lin_bound, lin_bound)
    hid_b = jax.random.uniform(k_hb, (protected_dim,), jnp.float32,
                               -lin_bound, lin_bound)
    return dict(c=c, w2=w2, b=b, hid_w=hid_w, hid_b=hid_b)


def fold_and_pad_params(params, input_dim, protected_dim, hidden_nodes=10):
    """One-time host-side fold (concat removal) and lane padding to 128."""
    assert protected_dim in (1, input_dim), (
        "(1 + |c|) * logits only broadcasts when protected_dim == input_dim or 1")
    D, H, P = input_dim, hidden_nodes, protected_dim
    h_pad = ((H + 127) // 128) * 128      # -> 128
    p_pad = ((P + 127) // 128) * 128      # -> 128

    w2 = params["w2"]                      # (3D, H)
    w0, w1, w2b = w2[:D], w2[D:2 * D], w2[2 * D:3 * D]
    w_a = w0 + w2b                         # multiplies s
    w_b = w1 - w2b                         # multiplies s*t

    w_a = jnp.pad(w_a, ((0, 0), (0, h_pad - H)))
    w_b = jnp.pad(w_b, ((0, 0), (0, h_pad - H)))
    b = jnp.pad(params["b"].reshape(1, H), ((0, 0), (0, h_pad - H)))
    hid_w = jnp.pad(params["hid_w"], ((0, h_pad - H), (0, p_pad - P)))
    hid_b = jnp.pad(params["hid_b"].reshape(1, P), ((0, 0), (0, p_pad - P)))
    scale = (1.0 + jnp.abs(params["c"])).reshape(1, -1)   # (1, P) == (1, D) or (1, 1)

    return dict(scale=scale, w_a=w_a, w_b=w_b, b=b, hid_w=hid_w, hid_b=hid_b,
                p=P, h_pad=h_pad, p_pad=p_pad)


def d_net2_forward(logits, targets, kp, *, tb=128):
    """Batch-tiled Pallas forward. Returns (z_hat, sigmoid(z_hat))."""
    B, D = logits.shape
    P, h_pad, p_pad = kp["p"], kp["h_pad"], kp["p_pad"]
    c_dim = kp["scale"].shape[1]

    # Batch tile: multiple of 8 sublanes, bounded by the (padded) batch.
    tb = max(8, min(tb, pl.cdiv(B, 8) * 8))
    b_pad = pl.cdiv(B, tb) * tb
    if b_pad != B:
        logits = jnp.pad(logits, ((0, b_pad - B), (0, 0)))
        targets = jnp.pad(targets, ((0, b_pad - B), (0, 0)))

    kernel = functools.partial(dnet2_kernel, p_pad=p_pad)
    out = pl.pallas_call(
        kernel,
        out_shape=jax.ShapeDtypeStruct((b_pad, 2 * p_pad), jnp.float32),
        grid=(b_pad // tb,),
        in_specs=[
            pl.BlockSpec((tb, D), lambda i: (i, 0)),          # logits
            pl.BlockSpec((tb, D), lambda i: (i, 0)),          # targets
            pl.BlockSpec((1, c_dim), lambda i: (0, 0)),       # scale = 1 + |c|
            pl.BlockSpec((D, h_pad), lambda i: (0, 0)),       # w_a
            pl.BlockSpec((D, h_pad), lambda i: (0, 0)),       # w_b
            pl.BlockSpec((1, h_pad), lambda i: (0, 0)),       # b
            pl.BlockSpec((h_pad, p_pad), lambda i: (0, 0)),   # hid_w (H_pad, P_pad)
            pl.BlockSpec((1, p_pad), lambda i: (0, 0)),       # hid_b
        ],
        out_specs=pl.BlockSpec((tb, 2 * p_pad), lambda i: (i, 0)),
        compiler_params=pltpu.CompilerParams(
            dimension_semantics=("parallel",)),
    )(logits, targets, kp["scale"], kp["w_a"], kp["w_b"], kp["b"],
      kp["hid_w"], kp["hid_b"])

    z_hat = out[:B, :P]
    z_sig = out[:B, p_pad:p_pad + P]
    return z_hat, z_sig


def d_net2_reference(logits, targets, params):
    """Pure-JAX reference matching the PyTorch forward semantics."""
    c = params["c"].reshape(1, -1)
    s = jax.nn.sigmoid((1.0 + jnp.abs(c)) * logits)
    cat = jnp.concatenate([s, s * targets, s * (1.0 - targets)], axis=1)
    z1 = cat @ params["w2"] + params["b"]
    z2 = z1 @ params["hid_w"] + params["hid_b"]
    return z2, jax.nn.sigmoid(z2)


if __name__ == "__main__":
    key = jax.random.PRNGKey(0)
    k_logits, k_targets, k_params = jax.random.split(key, 3)

    batch = 256          # small, but exercises the batch grid (grid = 2 at tb=128)
    input_dim = 4
    protected_dim = 4    # must equal input_dim (or 1) for the (1+|c|)*logits broadcast

    logits = jax.random.normal(k_logits, (batch, input_dim), jnp.float32)
    targets = jax.random.bernoulli(
        k_targets, 0.5, (batch, input_dim)).astype(jnp.float32)

    params = init_params(k_params, input_dim, protected_dim)
    kparams = fold_and_pad_params(params, input_dim, protected_dim)

    z_hat, z_sig = d_net2_forward(logits, targets, kparams, tb=128)
    jax.block_until_ready((z_hat, z_sig))

    z_ref, sig_ref = d_net2_reference(logits, targets, params)
    assert z_hat.shape == (batch, protected_dim)
    assert z_sig.shape == (batch, protected_dim)
    assert jnp.allclose(z_hat, z_ref, atol=1e-5, rtol=1e-5)
    assert jnp.allclose(z_sig, sig_ref, atol=1e-5, rtol=1e-5)

    print("KERNEL_OK")
</pallas_src>

<mosaic_0001>
module attributes {stable_mosaic.version = 11 : i64} {
  func.func @dnet2_kernel(%arg0: i32, %arg1: memref<128x4xf32, #tpu.memory_space<vmem>>, %arg2: memref<128x4xf32, #tpu.memory_space<vmem>>, %arg3: memref<1x4xf32, #tpu.memory_space<vmem>>, %arg4: memref<4x128xf32, #tpu.memory_space<vmem>>, %arg5: memref<4x128xf32, #tpu.memory_space<vmem>>, %arg6: memref<1x128xf32, #tpu.memory_space<vmem>>, %arg7: memref<128x128xf32, #tpu.memory_space<vmem>>, %arg8: memref<1x128xf32, #tpu.memory_space<vmem>>, %arg9: memref<128x256xf32, #tpu.memory_space<vmem>>) attributes {dimension_semantics = [#tpu.dimension_semantics<parallel>], iteration_bounds = array<i64: 2>, scalar_prefetch = 0 : i64, scratch_operands = 0 : i64, tpu.core_type = #tpu.core_type<tc>, window_params = [{transform_indices = @transform_0, window_bounds = array<i64: 128, 4>}, {transform_indices = @transform_1, window_bounds = array<i64: 128, 4>}, {pipeline_mode = #tpu.pipeline_mode<synchronous>, transform_indices = @transform_2, window_bounds = array<i64: 1, 4>}, {pipeline_mode = #tpu.pipeline_mode<synchronous>, transform_indices = @transform_3, window_bounds = array<i64: 4, 128>}, {pipeline_mode = #tpu.pipeline_mode<synchronous>, transform_indices = @transform_4, window_bounds = array<i64: 4, 128>}, {pipeline_mode = #tpu.pipeline_mode<synchronous>, transform_indices = @transform_5, window_bounds = array<i64: 1, 128>}, {pipeline_mode = #tpu.pipeline_mode<synchronous>, transform_indices = @transform_6, window_bounds = array<i64: 128, 128>}, {pipeline_mode = #tpu.pipeline_mode<synchronous>, transform_indices = @transform_7, window_bounds = array<i64: 1, 128>}, {transform_indices = @transform_8, window_bounds = array<i64: 128, 256>}]} {
    %c0 = arith.constant 0 : index
    %c0_0 = arith.constant 0 : index
    %0 = vector.load %arg1[%c0, %c0_0] : memref<128x4xf32, #tpu.memory_space<vmem>>, vector<128x4xf32>
    %c0_1 = arith.constant 0 : index
    %c0_2 = arith.constant 0 : index
    %1 = vector.load %arg2[%c0_1, %c0_2] : memref<128x4xf32, #tpu.memory_space<vmem>>, vector<128x4xf32>
    %c0_3 = arith.constant 0 : index
    %c0_4 = arith.constant 0 : index
    %2 = vector.load %arg3[%c0_3, %c0_4] : memref<1x4xf32, #tpu.memory_space<vmem>>, vector<1x4xf32>
    %3 = vector.broadcast %2 : vector<1x4xf32> to vector<128x4xf32>
    %4 = arith.mulf %3, %0 : vector<128x4xf32>
    %5 = arith.negf %4 : vector<128x4xf32>
    %6 = math.exp %5 : vector<128x4xf32>
    %cst = arith.constant 1.000000e+00 : f32
    %7 = vector.broadcast %cst : f32 to vector<128x4xf32>
    %8 = arith.addf %7, %6 : vector<128x4xf32>
    %9 = arith.divf %7, %8 : vector<128x4xf32>
    %10 = arith.mulf %9, %1 : vector<128x4xf32>
    %c0_5 = arith.constant 0 : index
    %c0_6 = arith.constant 0 : index
    %11 = vector.load %arg4[%c0_5, %c0_6] : memref<4x128xf32, #tpu.memory_space<vmem>>, vector<4x128xf32>
    %cst_7 = arith.constant dense<0.000000e+00> : vector<128x128xf32>
    %12 = tpu.matmul %9, %11, %cst_7 {dimension_numbers = #tpu.dot_dimension_numbers<[1], [0], [0], [1], [0, 0, 1, 1], [], []>} : vector<128x4xf32>, vector<4x128xf32>, vector<128x128xf32> -> vector<128x128xf32>
    %c0_8 = arith.constant 0 : index
    %c0_9 = arith.constant 0 : index
    %13 = vector.load %arg5[%c0_8, %c0_9] : memref<4x128xf32, #tpu.memory_space<vmem>>, vector<4x128xf32>
    %cst_10 = arith.constant dense<0.000000e+00> : vector<128x128xf32>
    %14 = tpu.matmul %10, %13, %cst_10 {dimension_numbers = #tpu.dot_dimension_numbers<[1], [0], [0], [1], [0, 0, 1, 1], [], []>} : vector<128x4xf32>, vector<4x128xf32>, vector<128x128xf32> -> vector<128x128xf32>
    %15 = arith.addf %12, %14 : vector<128x128xf32>
    %c0_11 = arith.constant 0 : index
    %c0_12 = arith.constant 0 : index
    %16 = vector.load %arg6[%c0_11, %c0_12] : memref<1x128xf32, #tpu.memory_space<vmem>>, vector<1x128xf32>
    %17 = vector.broadcast %16 : vector<1x128xf32> to vector<128x128xf32>
    %18 = arith.addf %15, %17 : vector<128x128xf32>
    %c0_13 = arith.constant 0 : index
    %c0_14 = arith.constant 0 : index
    %19 = vector.load %arg7[%c0_13, %c0_14] : memref<128x128xf32, #tpu.memory_space<vmem>>, vector<128x128xf32>
    %cst_15 = arith.constant dense<0.000000e+00> : vector<128x128xf32>
    %20 = tpu.matmul %18, %19, %cst_15 {dimension_numbers = #tpu.dot_dimension_numbers<[1], [0], [0], [1], [0, 0, 1, 1], [], []>} : vector<128x128xf32>, vector<128x128xf32>, vector<128x128xf32> -> vector<128x128xf32>
    %c0_16 = arith.constant 0 : index
    %c0_17 = arith.constant 0 : index
    %21 = vector.load %arg8[%c0_16, %c0_17] : memref<1x128xf32, #tpu.memory_space<vmem>>, vector<1x128xf32>
    %22 = vector.broadcast %21 : vector<1x128xf32> to vector<128x128xf32>
    %23 = arith.addf %20, %22 : vector<128x128xf32>
    %c0_18 = arith.constant 0 : index
    %c0_19 = arith.constant 0 : index
    %24 = vector.load %arg9[%c0_18, %c0_19] : memref<128x256xf32, #tpu.memory_space<vmem>>, vector<128x128xf32>
    tpu.vector_store %arg9[%c0_18, %c0_19], %23 {strides = array<i32>} : memref<128x256xf32, #tpu.memory_space<vmem>>, vector<128x128xf32>,
    %25 = arith.negf %23 : vector<128x128xf32>
    %26 = math.exp %25 : vector<128x128xf32>
    %cst_20 = arith.constant 1.000000e+00 : f32
    %27 = vector.broadcast %cst_20 : f32 to vector<128x128xf32>
    %28 = arith.addf %27, %26 : vector<128x128xf32>
    %29 = arith.divf %27, %28 : vector<128x128xf32>
    %c0_21 = arith.constant 0 : index
    %c128 = arith.constant 128 : index
    %30 = vector.load %arg9[%c0_21, %c128] : memref<128x256xf32, #tpu.memory_space<vmem>>, vector<128x128xf32>
    tpu.vector_store %arg9[%c0_21, %c128], %29 {strides = array<i32>} : memref<128x256xf32, #tpu.memory_space<vmem>>, vector<128x128xf32>,
    return
  }
  func.func @transform_0(%arg0: i32) -> (i32, i32) {
    %c0_i32 = arith.constant 0 : i32
    %c0_i32_0 = arith.constant 0 : i32
    return %arg0, %c0_i32 : i32, i32
  }
  func.func @transform_1(%arg0: i32) -> (i32, i32) {
    %c0_i32 = arith.constant 0 : i32
    %c0_i32_0 = arith.constant 0 : i32
    return %arg0, %c0_i32 : i32, i32
  }
  func.func @transform_2(%arg0: i32) -> (i32, i32) {
    %c0_i32 = arith.constant 0 : i32
    %c0_i32_0 = arith.constant 0 : i32
    %c0_i32_1 = arith.constant 0 : i32
    return %c0_i32, %c0_i32_0 : i32, i32
  }
  func.func @transform_3(%arg0: i32) -> (i32, i32) {
    %c0_i32 = arith.constant 0 : i32
    %c0_i32_0 = arith.constant 0 : i32
    %c0_i32_1 = arith.constant 0 : i32
    return %c0_i32, %c0_i32_0 : i32, i32
  }
  func.func @transform_4(%arg0: i32) -> (i32, i32) {
    %c0_i32 = arith.constant 0 : i32
    %c0_i32_0 = arith.constant 0 : i32
    %c0_i32_1 = arith.constant 0 : i32
    return %c0_i32, %c0_i32_0 : i32, i32
  }
  func.func @transform_5(%arg0: i32) -> (i32, i32) {
    %c0_i32 = arith.constant 0 : i32
    %c0_i32_0 = arith.constant 0 : i32
    %c0_i32_1 = arith.constant 0 : i32
    return %c0_i32, %c0_i32_0 : i32, i32
  }
  func.func @transform_6(%arg0: i32) -> (i32, i32) {
    %c0_i32 = arith.constant 0 : i32
    %c0_i32_0 = arith.constant 0 : i32
    %c0_i32_1 = arith.constant 0 : i32
    return %c0_i32, %c0_i32_0 : i32, i32
  }
  func.func @transform_7(%arg0: i32) -> (i32, i32) {
    %c0_i32 = arith.constant 0 : i32
    %c0_i32_0 = arith.constant 0 : i32
    %c0_i32_1 = arith.constant 0 : i32
    return %c0_i32, %c0_i32_0 : i32, i32
  }
  func.func @transform_8(%arg0: i32) -> (i32, i32) {
    %c0_i32 = arith.constant 0 : i32
    %c0_i32_0 = arith.constant 0 : i32
    return %arg0, %c0_i32 : i32, i32
  }
}

</mosaic_0001>

<llo_original>
// kernel: tpu_custom_call.1
$region0: #{tpu_custom_call.1}
  #allocation0 [shape = 'u32[]', space=smem, size = 0x4, offset = 0x4, fixed_abs, tag = 'smem constant byte address 0x4 - core index']
  #allocation1 [shape = 'u32[144,128]{1,0:T(1,128)}', space=vmem, size = 0x12000, scoped, tag = 'internal scratch']
  %s0 = inlined_call_operand.vmem [shape: f32[256,4], index: 0, kind: input, shape index: {}]
  %s1 = inlined_call_operand.vmem [shape: f32[256,4], index: 1, kind: input, shape index: {}]
  %s2 = inlined_call_operand.vmem [shape: f32[1,4], index: 2, kind: input, shape index: {}]
  %s3 = inlined_call_operand.vmem [shape: f32[4,128], index: 3, kind: input, shape index: {}]
  %s4 = inlined_call_operand.vmem [shape: f32[4,128], index: 4, kind: input, shape index: {}]
  %s5 = inlined_call_operand.vmem [shape: f32[1,128], index: 5, kind: input, shape index: {}]
  %s6 = inlined_call_operand.vmem [shape: f32[128,128], index: 6, kind: input, shape index: {}]
  %s7 = inlined_call_operand.vmem [shape: f32[1,128], index: 7, kind: input, shape index: {}]
  %s8 = inlined_call_operand.hbm [shape: f32[256,256], index: 8, kind: output, shape index: {}]
  %s9 = sld [smem:[#allocation0]]
  $region65: #{tpu_custom_call.1} parent=0
    _
  %s11 = ssub.s32 1, %s9
  %s12 = scalar_select 0, %s11, %s9
  $region1: #{tpu_custom_call.1} parent=0
    #allocation2 [shape = 'u8[262144]{0}', space=vmem, size = 0x40000, scoped, tag = 'output window, operand 0']
    #allocation3 [shape = 's32[2]{0}', space=sflag, size = 0x8, scoped, tag = 'scoped memory for tpu_custom_call.1']
    %13 = vsyncpa [#allocation3], 0
    %s14 = scalar_lea.sflag [#allocation3], 1
    %15 = vsyncpa %s14, 0
    loop: start=0, step=1, limit=4
    $region2: #{tpu_custom_call.1} parent=1 // loop_pre_header
      _
    $region3: #{tpu_custom_call.1} parent=1 // loop_header
      %s17 = sphi 0, %s21
      %p18 = scmp.ge.s32.totalorder %s17, 4
      %s27 = sphi 0, %s29
      %s30 = sphi 0, %s27
      %s31 = sphi 0, %s30
      %s47 = sphi 0, %s31
      %s53 = sphi 0, %s55
      %s56 = sphi 0, %s53
      %s57 = sphi 0, %s56
      %s73 = sphi 0, %s57
      %s77 = sphi 0, %s77
      %s79 = sphi 0, %s77
      %s80 = sphi 0, %s79
      %s94 = sphi 0, %s80
      %s98 = sphi 0, %s98
      %s100 = sphi 0, %s98
      %s101 = sphi 0, %s100
      %s115 = sphi 0, %s101
      %s119 = sphi 0, %s119
      %s121 = sphi 0, %s119
      %s122 = sphi 0, %s121
      %s136 = sphi 0, %s122
      %s140 = sphi 0, %s140
      %s142 = sphi 0, %s140
      %s143 = sphi 0, %s142
      %s157 = sphi 0, %s143
      %s161 = sphi 0, %s161
      %s163 = sphi 0, %s161
      %s164 = sphi 0, %s163
      %s178 = sphi 0, %s164
      %s182 = sphi 0, %s182
      %s184 = sphi 0, %s182
      %s185 = sphi 0, %s184
      %s199 = sphi 0, %s185
      %s205 = sphi 0, %s207
      %s208 = sphi 0, %s205
      %s209 = sphi 0, %s208
      %s225 = sphi 0, %s209
    $region4: #{tpu_custom_call.1} parent=1 // loop_header_branch
      %20 = sbr.rel (%p18) target = $region8
    $region5: #{tpu_custom_call.1} parent=1 // loop_body
      %s22 = ssub.s32 %s17, 1
      %s23 = ssub.s32 %s17, 2
      %s24 = sadd.s32 %s17, 1
      %s25 = ssub.s32 %s17, %s24
      %p26 = scmp.eq.s32.totalorder %s25, 0
      %s28 = sadd.s32 %s27, 1
      %s29 = scalar_select %p26, %s27, %s28
      %p32 = pneg %p26
      %p33 = scmp.eq.s32.totalorder %s17, 1
      %p34 = por %p32, %p33
      %p35 = scmp.ne.s32.totalorder %s27, %s30
      %p36 = scmp.eq.s32.totalorder %s17, 0
      %p37 = por %p35, %p36
      %p38 = scmp.ne.s32.totalorder %s27, %s30
      %p39 = scmp.eq.s32.totalorder %s22, 1
      %p40 = por %p38, %p39
      %p41 = scmp.ne.s32.totalorder %s30, %s31
      %p42 = scmp.eq.s32.totalorder %s22, 0
      %p43 = por %p41, %p42
      %p44 = scmp.ne.s32.totalorder %s30, %s31
      %p45 = scmp.eq.s32.totalorder %s23, 1
      %p46 = por %p44, %p45
      %p48 = scmp.ne.s32.totalorder %s31, %s47
      %p49 = scmp.eq.s32.totalorder %s23, 0
      %p50 = por %p48, %p49
      %s51 = ssub.s32 %s17, %s24
      %p52 = scmp.eq.s32.totalorder %s51, 0
      %s54 = sadd.s32 %s53, 1
      %s55 = scalar_select %p52, %s53, %s54
      %p58 = pneg %p52
      %p59 = scmp.eq.s32.totalorder %s17, 1
      %p60 = por %p58, %p59
      %p61 = scmp.ne.s32.totalorder %s53, %s56
      %p62 = scmp.eq.s32.totalorder %s17, 0
      %p63 = por %p61, %p62
      %p64 = scmp.ne.s32.totalorder %s53, %s56
      %p65 = scmp.eq.s32.totalorder %s22, 1
      %p66 = por %p64, %p65
      %p67 = scmp.ne.s32.totalorder %s56, %s57
      %p68 = scmp.eq.s32.totalorder %s22, 0
      %p69 = por %p67, %p68
      %p70 = scmp.ne.s32.totalorder %s56, %s57
      %p71 = scmp.eq.s32.totalorder %s23, 1
      %p72 = por %p70, %p71
      %p74 = scmp.ne.s32.totalorder %s57, %s73
      %p75 = scmp.eq.s32.totalorder %s23, 0
      %p76 = por %p74, %p75
      %s78 = sadd.s32 %s77, 1
      %p81 = scmp.eq.s32.totalorder %s17, 1
      %p82 = scmp.ne.s32.totalorder %s77, %s79
      %p83 = scmp.eq.s32.totalorder %s17, 0
      %p84 = por %p82, %p83
      %p85 = scmp.ne.s32.totalorder %s77, %s79
      %p86 = scmp.eq.s32.totalorder %s22, 1
      %p87 = por %p85, %p86
      %p88 = scmp.ne.s32.totalorder %s79, %s80
      %p89 = scmp.eq.s32.totalorder %s22, 0
      %p90 = por %p88, %p89
      %p91 = scmp.ne.s32.totalorder %s79, %s80
      %p92 = scmp.eq.s32.totalorder %s23, 1
      %p93 = por %p91, %p92
      %p95 = scmp.ne.s32.totalorder %s80, %s94
      %p96 = scmp.eq.s32.totalorder %s23, 0
      %p97 = por %p95, %p96
      %s99 = sadd.s32 %s98, 1
      %p102 = scmp.eq.s32.totalorder %s17, 1
      %p103 = scmp.ne.s32.totalorder %s98, %s100
      %p104 = scmp.eq.s32.totalorder %s17, 0
      %p105 = por %p103, %p104
      %p106 = scmp.ne.s32.totalorder %s98, %s100
      %p107 = scmp.eq.s32.totalorder %s22, 1
      %p108 = por %p106, %p107
      %p109 = scmp.ne.s32.totalorder %s100, %s101
      %p110 = scmp.eq.s32.totalorder %s22, 0
      %p111 = por %p109, %p110
      %p112 = scmp.ne.s32.totalorder %s100, %s101
      %p113 = scmp.eq.s32.totalorder %s23, 1
      %p114 = por %p112, %p113
      %p116 = scmp.ne.s32.totalorder %s101, %s115
      %p117 = scmp.eq.s32.totalorder %s23, 0
      %p118 = por %p116, %p117
      %s120 = sadd.s32 %s119, 1
      %p123 = scmp.eq.s32.totalorder %s17, 1
      %p124 = scmp.ne.s32.totalorder %s119, %s121
      %p125 = scmp.eq.s32.totalorder %s17, 0
      %p126 = por %p124, %p125
      %p127 = scmp.ne.s32.totalorder %s119, %s121
      %p128 = scmp.eq.s32.totalorder %s22, 1
      %p129 = por %p127, %p128
      %p130 = scmp.ne.s32.totalorder %s121, %s122
      %p131 = scmp.eq.s32.totalorder %s22, 0
      %p132 = por %p130, %p131
      %p133 = scmp.ne.s32.totalorder %s121, %s122
      %p134 = scmp.eq.s32.totalorder %s23, 1
      %p135 = por %p133, %p134
      %p137 = scmp.ne.s32.totalorder %s122, %s136
      %p138 = scmp.eq.s32.totalorder %s23, 0
      %p139 = por %p137, %p138
      %s141 = sadd.s32 %s140, 1
      %p144 = scmp.eq.s32.totalorder %s17, 1
      %p145 = scmp.ne.s32.totalorder %s140, %s142
      %p146 = scmp.eq.s32.totalorder %s17, 0
      %p147 = por %p145, %p146
      %p148 = scmp.ne.s32.totalorder %s140, %s142
      %p149 = scmp.eq.s32.totalorder %s22, 1
      %p150 = por %p148, %p149
      %p151 = scmp.ne.s32.totalorder %s142, %s143
      %p152 = scmp.eq.s32.totalorder %s22, 0
      %p153 = por %p151, %p152
      %p154 = scmp.ne.s32.totalorder %s142, %s143
      %p155 = scmp.eq.s32.totalorder %s23, 1
      %p156 = por %p154, %p155
      %p158 = scmp.ne.s32.totalorder %s143, %s157
      %p159 = scmp.eq.s32.totalorder %s23, 0
      %p160 = por %p158, %p159
      %s162 = sadd.s32 %s161, 1
      %p165 = scmp.eq.s32.totalorder %s17, 1
      %p166 = scmp.ne.s32.totalorder %s161, %s163
      %p167 = scmp.eq.s32.totalorder %s17, 0
      %p168 = por %p166, %p167
      %p169 = scmp.ne.s32.totalorder %s161, %s163
      %p170 = scmp.eq.s32.totalorder %s22, 1
      %p171 = por %p169, %p170
      %p172 = scmp.ne.s32.totalorder %s163, %s164
      %p173 = scmp.eq.s32.totalorder %s22, 0
      %p174 = por %p172, %p173
      %p175 = scmp.ne.s32.totalorder %s163, %s164
      %p176 = scmp.eq.s32.totalorder %s23, 1
      %p177 = por %p175, %p176
      %p179 = scmp.ne.s32.totalorder %s164, %s178
      %p180 = scmp.eq.s32.totalorder %s23, 0
      %p181 = por %p179, %p180
      %s183 = sadd.s32 %s182, 1
      %p186 = scmp.eq.s32.totalorder %s17, 1
      %p187 = scmp.ne.s32.totalorder %s182, %s184
      %p188 = scmp.eq.s32.totalorder %s17, 0
      %p189 = por %p187, %p188
      %p190 = scmp.ne.s32.totalorder %s182, %s184
      %p191 = scmp.eq.s32.totalorder %s22, 1
      %p192 = por %p190, %p191
      %p193 = scmp.ne.s32.totalorder %s184, %s185
      %p194 = scmp.eq.s32.totalorder %s22, 0
      %p195 = por %p193, %p194
      %p196 = scmp.ne.s32.totalorder %s184, %s185
      %p197 = scmp.eq.s32.totalorder %s23, 1
      %p198 = por %p196, %p197
      %p200 = scmp.ne.s32.totalorder %s185, %s199
      %p201 = scmp.eq.s32.totalorder %s23, 0
      %p202 = por %p200, %p201
      %s203 = ssub.s32 %s17, %s24
      %p204 = scmp.eq.s32.totalorder %s203, 0
      %s206 = sadd.s32 %s205, 1
      %s207 = scalar_select %p204, %s205, %s206
      %p210 = pneg %p204
      %p211 = scmp.eq.s32.totalorder %s17, 1
      %p212 = por %p210, %p211
      %p213 = scmp.ne.s32.totalorder %s205, %s208
      %p214 = scmp.eq.s32.totalorder %s17, 0
      %p215 = por %p213, %p214
      %p216 = scmp.ne.s32.totalorder %s205, %s208
      %p217 = scmp.eq.s32.totalorder %s22, 1
      %p218 = por %p216, %p217
      %p219 = scmp.ne.s32.totalorder %s208, %s209
      %p220 = scmp.eq.s32.totalorder %s22, 0
      %p221 = por %p219, %p220
      %p222 = scmp.ne.s32.totalorder %s208, %s209
      %p223 = scmp.eq.s32.totalorder %s23, 1
      %p224 = por %p222, %p223
      %p226 = scmp.ne.s32.totalorder %s209, %s225
      %p227 = scmp.eq.s32.totalorder %s23, 0
      %p228 = por %p226, %p227
      %p229 = scmp.le.s32.totalorder 1, %s17
      %p230 = scmp.lt.s32.totalorder %s17, 3
      %p231 = pnand %p229, %p230
      %p232 = pneg %p231
      // Predicated region
      $region9: #{tpu_custom_call.1} parent=5 // pred_check
        _
      $region10: #{tpu_custom_call.1} parent=5 // pred_check_branch
        %234 = sbr.rel (%p231) target = $region12
      $region11: #{tpu_custom_call.1} parent=5 // pred_region
        %s235 = ssub.s32 %s17, 1
        // Predicated region
        $region13: #{tpu_custom_call.1} parent=11 // pred_check
          %p236 = pneg %p90
        $region14: #{tpu_custom_call.1} parent=11 // pred_check_branch
          %238 = sbr.rel (%p236) target = $region16
        $region15: #{tpu_custom_call.1} parent=11 // pred_region
          _
        $region16: #{tpu_custom_call.1} parent=11 // pred_fallthru
          _
        // Predicated region
        $region17: #{tpu_custom_call.1} parent=11 // pred_check
          %p239 = pneg %p111
        $region18: #{tpu_custom_call.1} parent=11 // pred_check_branch
          %241 = sbr.rel (%p239) target = $region20
        $region19: #{tpu_custom_call.1} parent=11 // pred_region
          _
        $region20: #{tpu_custom_call.1} parent=11 // pred_fallthru
          _
        // Predicated region
        $region21: #{tpu_custom_call.1} parent=11 // pred_check
          %p242 = pneg %p132
        $region22: #{tpu_custom_call.1} parent=11 // pred_check_branch
          %244 = sbr.rel (%p242) target = $region24
        $region23: #{tpu_custom_call.1} parent=11 // pred_region
          _
        $region24: #{tpu_custom_call.1} parent=11 // pred_fallthru
          _
        // Predicated region
        $region25: #{tpu_custom_call.1} parent=11 // pred_check
          %p245 = pneg %p153
        $region26: #{tpu_custom_call.1} parent=11 // pred_check_branch
          %247 = sbr.rel (%p245) target = $region28
        $region27: #{tpu_custom_call.1} parent=11 // pred_region
          _
        $region28: #{tpu_custom_call.1} parent=11 // pred_fallthru
          _
        // Predicated region
        $region29: #{tpu_custom_call.1} parent=11 // pred_check
          %p248 = pneg %p174
        $region30: #{tpu_custom_call.1} parent=11 // pred_check_branch
          %250 = sbr.rel (%p248) target = $region32
        $region31: #{tpu_custom_call.1} parent=11 // pred_region
          _
        $region32: #{tpu_custom_call.1} parent=11 // pred_fallthru
          _
        // Predicated region
        $region33: #{tpu_custom_call.1} parent=11 // pred_check
          %p251 = pneg %p195
        $region34: #{tpu_custom_call.1} parent=11 // pred_check_branch
          %253 = sbr.rel (%p251) target = $region36
        $region35: #{tpu_custom_call.1} parent=11 // pred_region
          _
        $region36: #{tpu_custom_call.1} parent=11 // pred_fallthru
          _
      $region12: #{tpu_custom_call.1} parent=5 // pred_fallthru
        _
      %p254 = scmp.lt.s32.totalorder %s17, 2
      // Predicated region
      $region37: #{tpu_custom_call.1} parent=5 // pred_check
        %p255 = pneg %p254
      $region38: #{tpu_custom_call.1} parent=5 // pred_check_branch
        %257 = sbr.rel (%p255) target = $region40
      $region39: #{tpu_custom_call.1} parent=5 // pred_region
        // Predicated region
        $region41: #{tpu_custom_call.1} parent=39 // pred_check
          %p258 = pneg %p37
        $region42: #{tpu_custom_call.1} parent=39 // pred_check_branch
          %260 = sbr.rel (%p258) target = $region44
        $region43: #{tpu_custom_call.1} parent=39 // pred_region
          %s261 = smul.u32 16, %s17
          %p262 = scmp.lt.s32.totalorder %s261, 31
          %s263 = scalar_select %p262, %s261, 31
          %s264 = smul.addr %s263, 8
          %s265 = scalar_lea.vmem %s0, %s264
          %s266 = smul.u32 16, %s17
        $region44: #{tpu_custom_call.1} parent=39 // pred_fallthru
          _
        // Predicated region
        $region45: #{tpu_custom_call.1} parent=39 // pred_check
          %p267 = pneg %p63
        $region46: #{tpu_custom_call.1} parent=39 // pred_check_branch
          %269 = sbr.rel (%p267) target = $region48
        $region47: #{tpu_custom_call.1} parent=39 // pred_region
          %s270 = smul.u32 16, %s17
          %p271 = scmp.lt.s32.totalorder %s270, 31
          %s272 = scalar_select %p271, %s270, 31
          %s273 = smul.addr %s272, 8
          %s274 = scalar_lea.vmem %s1, %s273
          %s275 = smul.u32 16, %s17
        $region48: #{tpu_custom_call.1} parent=39 // pred_fallthru
          _
      $region40: #{tpu_custom_call.1} parent=5 // pred_fallthru
        _
      %p276 = scmp.le.s32.totalorder 1, %s17
      %p277 = scmp.lt.s32.totalorder %s17, 3
      %p278 = pnand %p276, %p277
      %p279 = pneg %p278
      // Predicated region
      $region49: #{tpu_custom_call.1} parent=5 // pred_check
        _
      $region50: #{tpu_custom_call.1} parent=5 // pred_check_branch
        %281 = sbr.rel (%p278) target = $region52
      $region51: #{tpu_custom_call.1} parent=5 // pred_region
        %s282 = ssub.s32 %s17, 1
        %s283 = smul.u32 16, %s22
        %p284 = scmp.lt.s32.totalorder %s283, 31
        %s285 = scalar_select %p284, %s283, 31
        %s286 = smul.addr %s285, 8
        %s287 = scalar_lea.vmem %s0, %s286
        %p288 = pneg %p43
        %p289 = pneg %p40
        %s290 = smul.u32 16, %s22
        %p291 = scmp.lt.s32.totalorder %s290, 31
        %s292 = scalar_select %p291, %s290, 31
        %s293 = smul.addr %s292, 8
        %s294 = scalar_lea.vmem %s1, %s293
        %p295 = pneg %p69
        %p296 = pneg %p66
        %p297 = pneg %p90
        %p298 = pneg %p87
        %p299 = pneg %p111
        %p300 = pneg %p108
        %p301 = pneg %p132
        %p302 = pneg %p129
        %p303 = pneg %p153
        %p304 = pneg %p150
        %p305 = pneg %p174
        %p306 = pneg %p171
        %p307 = pneg %p195
        %p308 = pneg %p192
        %p309 = pneg %p221
        %p310 = pneg %p218
        %s311 = sand.u32 %s208, 1
        %s312 = scalar_lea.sflag [#allocation3], %s311
        %s313 = sand.u32 %s208, 1
        %s314 = smul.addr %s313, 256
        %s315 = scalar_lea.vmem [#allocation2], %s314
        %s316 = smul.u32 16, %s22
        %p317 = scmp.lt.s32.totalorder %s316, 31
        %s318 = scalar_select %p317, %s316, 31
        %s319 = smul.addr %s318, 8
        %s320 = scalar_lea.vmem %s0, %s319
        %s321 = smul.u32 16, %s22
        %s322 = smul.u32 16, %s22
        %p323 = scmp.lt.s32.totalorder %s322, 31
        %s324 = scalar_select %p323, %s322, 31
        %s325 = smul.addr %s324, 8
        %s326 = scalar_lea.vmem %s1, %s325
        %s327 = smul.u32 16, %s22
        %s328 = smul.u32 16, %s22
        %v329 = vld [vmem:[%s320] sm:$0xff]
        %v330 = vld [vmem:[%s320 + $0x8] sm:$0xff]
        %v331 = vld [vmem:[%s320 + $0x10] sm:$0xff]
        %v332 = vld [vmem:[%s320 + $0x18] sm:$0xff]
        %v333 = vld [vmem:[%s320 + $0x20] sm:$0xff]
        %v334 = vld [vmem:[%s320 + $0x28] sm:$0xff]
        %v335 = vld [vmem:[%s320 + $0x30] sm:$0xff]
        %v336 = vld [vmem:[%s320 + $0x38] sm:$0xff]
        %v337 = vld [vmem:[%s320 + $0x40] sm:$0xff]
        %v338 = vld [vmem:[%s320 + $0x48] sm:$0xff]
        %v339 = vld [vmem:[%s320 + $0x50] sm:$0xff]
        %v340 = vld [vmem:[%s320 + $0x58] sm:$0xff]
        %v341 = vld [vmem:[%s320 + $0x60] sm:$0xff]
        %v342 = vld [vmem:[%s320 + $0x68] sm:$0xff]
        %v343 = vld [vmem:[%s320 + $0x70] sm:$0xff]
        %v344 = vld [vmem:[%s320 + $0x78] sm:$0xff]
        %v345 = vld [vmem:[%s326] sm:$0xff]
        %v346 = vld [vmem:[%s326 + $0x8] sm:$0xff]
        %v347 = vld [vmem:[%s326 + $0x10] sm:$0xff]
        %v348 = vld [vmem:[%s326 + $0x18] sm:$0xff]
        %v349 = vld [vmem:[%s326 + $0x20] sm:$0xff]
        %v350 = vld [vmem:[%s326 + $0x28] sm:$0xff]
        %v351 = vld [vmem:[%s326 + $0x30] sm:$0xff]
        %v352 = vld [vmem:[%s326 + $0x38] sm:$0xff]
        %v353 = vld [vmem:[%s326 + $0x40] sm:$0xff]
        %v354 = vld [vmem:[%s326 + $0x48] sm:$0xff]
        %v355 = vld [vmem:[%s326 + $0x50] sm:$0xff]
        %v356 = vld [vmem:[%s326 + $0x58] sm:$0xff]
        %v357 = vld [vmem:[%s326 + $0x60] sm:$0xff]
        %v358 = vld [vmem:[%s326 + $0x68] sm:$0xff]
        %v359 = vld [vmem:[%s326 + $0x70] sm:$0xff]
        %v360 = vld [vmem:[%s326 + $0x78] sm:$0xff]
        %v361 = vld [vmem:[%s2] sm:$0x1]
        %v363 = vlaneseq
        %v364 = vshrl.u32 %v363, 7
        %v365 = vsub.s32 0, %v364
        %v366 = vrot.slane %v361, %v365
        %v368 = vmul.f32 %v366, %v329
        %v369 = vmul.f32 %v366, %v330
        %v370 = vmul.f32 %v366, %v331
        %v371 = vmul.f32 %v366, %v332
        %v372 = vmul.f32 %v366, %v333
        %v373 = vmul.f32 %v366, %v334
        %v374 = vmul.f32 %v366, %v335
        %v375 = vmul.f32 %v366, %v336
        %v376 = vmul.f32 %v366, %v337
        %v377 = vmul.f32 %v366, %v338
        %v378 = vmul.f32 %v366, %v339
        %v379 = vmul.f32 %v366, %v340
        %v380 = vmul.f32 %v366, %v341
        %v381 = vmul.f32 %v366, %v342
        %v382 = vmul.f32 %v366, %v343
        %v383 = vmul.f32 %v366, %v344
        %v384 = vxor.u32 %v368, 2147483648
        %v385 = vxor.u32 %v369, 2147483648
        %v386 = vxor.u32 %v370, 2147483648
        %v387 = vxor.u32 %v371, 2147483648
        %v388 = vxor.u32 %v372, 2147483648
        %v389 = vxor.u32 %v373, 2147483648
        %v390 = vxor.u32 %v374, 2147483648
        %v391 = vxor.u32 %v375, 2147483648
        %v392 = vxor.u32 %v376, 2147483648
        %v393 = vxor.u32 %v377, 2147483648
        %v394 = vxor.u32 %v378, 2147483648
        %v395 = vxor.u32 %v379, 2147483648
        %v396 = vxor.u32 %v380, 2147483648
        %v397 = vxor.u32 %v381, 2147483648
        %v398 = vxor.u32 %v382, 2147483648
        %v399 = vxor.u32 %v383, 2147483648
        %v400 = vmul.f32 %v384, 1.442695
        %v401 = vpow.pop %v400
        %v402 = vmul.f32 %v385, 1.442695
        %v403 = vpow.pop %v402
        %v404 = vmul.f32 %v386, 1.442695
        %v405 = vpow.pop %v404
        %v406 = vmul.f32 %v387, 1.442695
        %v407 = vpow.pop %v406
        %v408 = vmul.f32 %v388, 1.442695
        %v409 = vpow.pop %v408
        %v410 = vmul.f32 %v389, 1.442695
        %v411 = vpow.pop %v410
        %v412 = vmul.f32 %v390, 1.442695
        %v413 = vpow.pop %v412
        %v414 = vmul.f32 %v391, 1.442695
        %v415 = vpow.pop %v414
        %v416 = vmul.f32 %v392, 1.442695
        %v417 = vpow.pop %v416
        %v418 = vmul.f32 %v393, 1.442695
        %v419 = vpow.pop %v418
        %v420 = vmul.f32 %v394, 1.442695
        %v421 = vpow.pop %v420
        %v422 = vmul.f32 %v395, 1.442695
        %v423 = vpow.pop %v422
        %v424 = vmul.f32 %v396, 1.442695
        %v425 = vpow.pop %v424
        %v426 = vmul.f32 %v397, 1.442695
        %v427 = vpow.pop %v426
        %v428 = vmul.f32 %v398, 1.442695
        %v429 = vpow.pop %v428
        %v430 = vmul.f32 %v399, 1.442695
        %v431 = vpow.pop %v430
        %v432 = vadd.f32 %v401, 1.0
        %v433 = vadd.f32 %v403, 1.0
        %v434 = vadd.f32 %v405, 1.0
        %v435 = vadd.f32 %v407, 1.0
        %v436 = vadd.f32 %v409, 1.0
        %v437 = vadd.f32 %v411, 1.0
        %v438 = vadd.f32 %v413, 1.0
        %v439 = vadd.f32 %v415, 1.0
        %v440 = vadd.f32 %v417, 1.0
        %v441 = vadd.f32 %v419, 1.0
        %v442 = vadd.f32 %v421, 1.0
        %v443 = vadd.f32 %v423, 1.0
        %v444 = vadd.f32 %v425, 1.0
        %v445 = vadd.f32 %v427, 1.0
        %v446 = vadd.f32 %v429, 1.0
        %v447 = vadd.f32 %v431, 1.0
        %v448 = vrcp.pop %v432
        %v449 = vmul.f32 1.0, %v448
        %v450 = vrcp.pop %v433
        %v451 = vmul.f32 1.0, %v450
        %v452 = vrcp.pop %v434
        %v453 = vmul.f32 1.0, %v452
        %v454 = vrcp.pop %v435
        %v455 = vmul.f32 1.0, %v454
        %v456 = vrcp.pop %v436
        %v457 = vmul.f32 1.0, %v456
        %v458 = vrcp.pop %v437
        %v459 = vmul.f32 1.0, %v458
        %v460 = vrcp.pop %v438
        %v461 = vmul.f32 1.0, %v460
        %v462 = vrcp.pop %v439
        %v463 = vmul.f32 1.0, %v462
        %v464 = vrcp.pop %v440
        %v465 = vmul.f32 1.0, %v464
        %v466 = vrcp.pop %v441
        %v467 = vmul.f32 1.0, %v466
        %v468 = vrcp.pop %v442
        %v469 = vmul.f32 1.0, %v468
        %v470 = vrcp.pop %v443
        %v471 = vmul.f32 1.0, %v470
        %v472 = vrcp.pop %v444
        %v473 = vmul.f32 1.0, %v472
        %v474 = vrcp.pop %v445
        %v475 = vmul.f32 1.0, %v474
        %v476 = vrcp.pop %v446
        %v477 = vmul.f32 1.0, %v476
        %v478 = vrcp.pop %v447
        %v479 = vmul.f32 1.0, %v478
        %v480 = vmul.f32 %v449, %v345
        %v481 = vmul.f32 %v451, %v346
        %v482 = vmul.f32 %v453, %v347
        %v483 = vmul.f32 %v455, %v348
        %v484 = vmul.f32 %v457, %v349
        %v485 = vmul.f32 %v459, %v350
        %v486 = vmul.f32 %v461, %v351
        %v487 = vmul.f32 %v463, %v352
        %v488 = vmul.f32 %v465, %v353
        %v489 = vmul.f32 %v467, %v354
        %v490 = vmul.f32 %v469, %v355
        %v491 = vmul.f32 %v471, %v356
        %v492 = vmul.f32 %v473, %v357
        %v493 = vmul.f32 %v475, %v358
        %v494 = vmul.f32 %v477, %v359
        %v495 = vmul.f32 %v479, %v360
        %v496 = vld [vmem:[%s3] sm:$0xf]
        %v497 = vld [vmem:[%s4] sm:$0xf]
        %vm498 = vcmask 31744
        %v500 = vsel %vm498, %v480, 0
        %v503 = vsel %vm498, %v481, 0
        %v506 = vsel %vm498, %v482, 0
        %v509 = vsel %vm498, %v483, 0
        %v512 = vsel %vm498, %v484, 0
        %v515 = vsel %vm498, %v485, 0
        %v518 = vsel %vm498, %v486, 0
        %v521 = vsel %vm498, %v487, 0
        %v524 = vsel %vm498, %v488, 0
        %v527 = vsel %vm498, %v489, 0
        %v530 = vsel %vm498, %v490, 0
        %v533 = vsel %vm498, %v491, 0
        %v536 = vsel %vm498, %v492, 0
        %v539 = vsel %vm498, %v493, 0
        %v542 = vsel %vm498, %v494, 0
        %v545 = vsel %vm498, %v495, 0
        %vm547 = vcmask 1043456
        %v549 = vsel %vm547, %v497, 0
        %551 = vmatprep.subr.mxu0 0.0
        %552 = vmatpush1.msra.mxu0 %v549
        %553 = vmatprep.subr.mxu0 0.0
        %554 = vmatpush1.msra.mxu0 0.0
        %555 = vmatprep.subr.mxu0 0.0
        %556 = vmatpush1.msra.mxu0 0.0
        %557 = vmatprep.subr.mxu0 0.0
        %558 = vmatpush1.msra.mxu0 0.0
        %559 = vmatprep.subr.mxu0 0.0
        %560 = vmatpush1.msra.mxu0 0.0
        %561 = vmatprep.subr.mxu0 0.0
        %562 = vmatpush1.msra.mxu0 0.0
        %563 = vmatprep.subr.mxu0 0.0
        %564 = vmatpush1.msra.mxu0 0.0
        %565 = vmatprep.subr.mxu0 0.0
        %566 = vmatpush1.msra.mxu0 0.0
        %567 = vmatprep.subr.mxu0 0.0
        %568 = vmatpush1.msra.mxu0 0.0
        %569 = vmatprep.subr.mxu0 0.0
        %570 = vmatpush1.msra.mxu0 0.0
        %571 = vmatprep.subr.mxu0 0.0
        %572 = vmatpush1.msra.mxu0 0.0
        %573 = vmatprep.subr.mxu0 0.0
        %574 = vmatpush1.msra.mxu0 0.0
        %575 = vmatprep.subr.mxu0 0.0
        %576 = vmatpush1.msra.mxu0 0.0
        %577 = vmatprep.subr.mxu0 0.0
        %578 = vmatpush1.msra.mxu0 0.0
        %579 = vmatprep.subr.mxu0 0.0
        %580 = vmatpush1.msra.mxu0 0.0
        %581 = vmatprep.subr.mxu0 0.0
        %582 = vmatpush1.msra.mxu0 0.0
        %583 = vmatprep.subr.mxu0 0.0
        %584 = vmatpush1.msra.mxu0 0.0
        %585 = vmatprep.subr.mxu0 0.0
        %586 = vmatpush1.msra.mxu0 0.0
        %587 = vmatprep.subr.mxu0 0.0
        %588 = vmatpush1.msra.mxu0 0.0
        %589 = vmatprep.subr.mxu0 0.0
        %590 = vmatpush1.msra.mxu0 0.0
        %591 = vmatprep.subr.mxu0 0.0
        %592 = vmatpush1.msra.mxu0 0.0
        %593 = vmatprep.subr.mxu0 0.0
        %594 = vmatpush1.msra.mxu0 0.0
        %595 = vmatprep.subr.mxu0 0.0
        %596 = vmatpush1.msra.mxu0 0.0
        %597 = vmatprep.subr.mxu0 0.0
        %598 = vmatpush1.msra.mxu0 0.0
        %599 = vmatprep.subr.mxu0 0.0
        %600 = vmatpush1.msra.mxu0 0.0
        %601 = vmatprep.subr.mxu0 0.0
        %602 = vmatpush1.msra.mxu0 0.0
        %603 = vmatprep.subr.mxu0 0.0
        %604 = vmatpush1.msra.mxu0 0.0
        %605 = vmatprep.subr.mxu0 0.0
        %606 = vmatpush1.msra.mxu0 0.0
        %607 = vmatprep.subr.mxu0 0.0
        %608 = vmatpush1.msra.mxu0 0.0
        %609 = vmatprep.subr.mxu0 0.0
        %610 = vmatpush1.msra.mxu0 0.0
        %611 = vmatprep.subr.mxu0 0.0
        %612 = vmatpush1.msra.mxu0 0.0
        %613 = vmatprep.subr.mxu0 0.0
        %614 = vmatpush1.msra.mxu0 0.0
        %615 = vmatprep.mubr.f32.mxu0 0.0
        %616 = vmatmul.mubr.f32.gmra.mrb[0].mxu0 %v500
        %v617 = vpop.f32.mrb[0].mxu0
        %v618 = vadd.f32 0.0, %v617
        %v619 = vpop.f32.mrb[0].mxu0
        %620 = vmatprep.mubr.f32.mxu0 0.0
        %621 = vmatmul.mubr.f32.gmra.mrb[0].mxu0 %v503
        %v622 = vpop.f32.mrb[0].mxu0
        %v623 = vadd.f32 0.0, %v622
        %v624 = vpop.f32.mrb[0].mxu0
        %625 = vmatprep.mubr.f32.mxu0 0.0
        %626 = vmatmul.mubr.f32.gmra.mrb[0].mxu0 %v506
        %v627 = vpop.f32.mrb[0].mxu0
        %v628 = vadd.f32 0.0, %v627
        %v629 = vpop.f32.mrb[0].mxu0
        %630 = vmatprep.mubr.f32.mxu0 0.0
        %631 = vmatmul.mubr.f32.gmra.mrb[0].mxu0 %v509
        %v632 = vpop.f32.mrb[0].mxu0
        %v633 = vadd.f32 0.0, %v632
        %v634 = vpop.f32.mrb[0].mxu0
        %635 = vmatprep.mubr.f32.mxu0 0.0
        %636 = vmatmul.mubr.f32.gmra.mrb[0].mxu0 %v512
        %v637 = vpop.f32.mrb[0].mxu0
        %v638 = vadd.f32 0.0, %v637
        %v639 = vpop.f32.mrb[0].mxu0
        %640 = vmatprep.mubr.f32.mxu0 0.0
        %641 = vmatmul.mubr.f32.gmra.mrb[0].mxu0 %v515
        %v642 = vpop.f32.mrb[0].mxu0
        %v643 = vadd.f32 0.0, %v642
        %v644 = vpop.f32.mrb[0].mxu0
        %645 = vmatprep.mubr.f32.mxu0 0.0
        %646 = vmatmul.mubr.f32.gmra.mrb[0].mxu0 %v518
        %v647 = vpop.f32.mrb[0].mxu0
        %v648 = vadd.f32 0.0, %v647
        %v649 = vpop.f32.mrb[0].mxu0
        %650 = vmatprep.mubr.f32.mxu0 0.0
        %651 = vmatmul.mubr.f32.gmra.mrb[0].mxu0 %v521
        %v652 = vpop.f32.mrb[0].mxu0
        %v653 = vadd.f32 0.0, %v652
        %v654 = vpop.f32.mrb[0].mxu0
        %655 = vmatprep.mubr.f32.mxu0 0.0
        %656 = vmatmul.mubr.f32.gmra.mrb[0].mxu0 %v524
        %v657 = vpop.f32.mrb[0].mxu0
        %v658 = vadd.f32 0.0, %v657
        %v659 = vpop.f32.mrb[0].mxu0
        %660 = vmatprep.mubr.f32.mxu0 0.0
        %661 = vmatmul.mubr.f32.gmra.mrb[0].mxu0 %v527
        %v662 = vpop.f32.mrb[0].mxu0
        %v663 = vadd.f32 0.0, %v662
        %v664 = vpop.f32.mrb[0].mxu0
        %665 = vmatprep.mubr.f32.mxu0 0.0
        %666 = vmatmul.mubr.f32.gmra.mrb[0].mxu0 %v530
        %v667 = vpop.f32.mrb[0].mxu0
        %v668 = vadd.f32 0.0, %v667
        %v669 = vpop.f32.mrb[0].mxu0
        %670 = vmatprep.mubr.f32.mxu0 0.0
        %671 = vmatmul.mubr.f32.gmra.mrb[0].mxu0 %v533
        %v672 = vpop.f32.mrb[0].mxu0
        %v673 = vadd.f32 0.0, %v672
        %v674 = vpop.f32.mrb[0].mxu0
        %675 = vmatprep.mubr.f32.mxu0 0.0
        %676 = vmatmul.mubr.f32.gmra.mrb[0].mxu0 %v536
        %v677 = vpop.f32.mrb[0].mxu0
        %v678 = vadd.f32 0.0, %v677
        %v679 = vpop.f32.mrb[0].mxu0
        %680 = vmatprep.mubr.f32.mxu0 0.0
        %681 = vmatmul.mubr.f32.gmra.mrb[0].mxu0 %v539
        %v682 = vpop.f32.mrb[0].mxu0
        %v683 = vadd.f32 0.0, %v682
        %v684 = vpop.f32.mrb[0].mxu0
        %685 = vmatprep.mubr.f32.mxu0 0.0
        %686 = vmatmul.mubr.f32.gmra.mrb[0].mxu0 %v542
        %v687 = vpop.f32.mrb[0].mxu0
        %v688 = vadd.f32 0.0, %v687
        %v689 = vpop.f32.mrb[0].mxu0
        %690 = vmatprep.mubr.f32.mxu0 0.0
        %691 = vmatmul.mubr.f32.gmra.mrb[0].mxu0 %v545
        %v692 = vpop.f32.mrb[0].mxu0
        %v693 = vadd.f32 0.0, %v692
        %v694 = vpop.f32.mrb[0].mxu0
        %695 = vdwg.mxu0
        %v697 = vsel %vm498, %v449, 0
        %v700 = vsel %vm498, %v451, 0
        %v703 = vsel %vm498, %v453, 0
        %v706 = vsel %vm498, %v455, 0
        %v709 = vsel %vm498, %v457, 0
        %v712 = vsel %vm498, %v459, 0
        %v715 = vsel %vm498, %v461, 0
        %v718 = vsel %vm498, %v463, 0
        %v721 = vsel %vm498, %v465, 0
        %v724 = vsel %vm498, %v467, 0
        %v727 = vsel %vm498, %v469, 0
        %v730 = vsel %vm498, %v471, 0
        %v733 = vsel %vm498, %v473, 0
        %v736 = vsel %vm498, %v475, 0
        %v739 = vsel %vm498, %v477, 0
        %v742 = vsel %vm498, %v479, 0
        %v745 = vsel %vm547, %v496, 0
        %747 = vmatprep.subr.mxu0 0.0
        %748 = vmatpush1.msra.mxu0 %v745
        %749 = vmatprep.subr.mxu0 0.0
        %750 = vmatpush1.msra.mxu0 0.0
        %751 = vmatprep.subr.mxu0 0.0
        %752 = vmatpush1.msra.mxu0 0.0
        %753 = vmatprep.subr.mxu0 0.0
        %754 = vmatpush1.msra.mxu0 0.0
        %755 = vmatprep.subr.mxu0 0.0
        %756 = vmatpush1.msra.mxu0 0.0
        %757 = vmatprep.subr.mxu0 0.0
        %758 = vmatpush1.msra.mxu0 0.0
        %759 = vmatprep.subr.mxu0 0.0
        %760 = vmatpush1.msra.mxu0 0.0
        %761 = vmatprep.subr.mxu0 0.0
        %762 = vmatpush1.msra.mxu0 0.0
        %763 = vmatprep.subr.mxu0 0.0
        %764 = vmatpush1.msra.mxu0 0.0
        %765 = vmatprep.subr.mxu0 0.0
        %766 = vmatpush1.msra.mxu0 0.0
        %767 = vmatprep.subr.mxu0 0.0
        %768 = vmatpush1.msra.mxu0 0.0
        %769 = vmatprep.subr.mxu0 0.0
        %770 = vmatpush1.msra.mxu0 0.0
        %771 = vmatprep.subr.mxu0 0.0
        %772 = vmatpush1.msra.mxu0 0.0
        %773 = vmatprep.subr.mxu0 0.0
        %774 = vmatpush1.msra.mxu0 0.0
        %775 = vmatprep.subr.mxu0 0.0
        %776 = vmatpush1.msra.mxu0 0.0
        %777 = vmatprep.subr.mxu0 0.0
        %778 = vmatpush1.msra.mxu0 0.0
        %779 = vmatprep.subr.mxu0 0.0
        %780 = vmatpush1.msra.mxu0 0.0
        %781 = vmatprep.subr.mxu0 0.0
        %782 = vmatpush1.msra.mxu0 0.0
        %783 = vmatprep.subr.mxu0 0.0
        %784 = vmatpush1.msra.mxu0 0.0
        %785 = vmatprep.subr.mxu0 0.0
        %786 = vmatpush1.msra.mxu0 0.0
        %787 = vmatprep.subr.mxu0 0.0
        %788 = vmatpush1.msra.mxu0 0.0
        %789 = vmatprep.subr.mxu0 0.0
        %790 = vmatpush1.msra.mxu0 0.0
        %791 = vmatprep.subr.mxu0 0.0
        %792 = vmatpush1.msra.mxu0 0.0
        %793 = vmatprep.subr.mxu0 0.0
        %794 = vmatpush1.msra.mxu0 0.0
        %795 = vmatprep.subr.mxu0 0.0
        %796 = vmatpush1.msra.mxu0 0.0
        %797 = vmatprep.subr.mxu0 0.0
        %798 = vmatpush1.msra.mxu0 0.0
        %799 = vmatprep.subr.mxu0 0.0
        %800 = vmatpush1.msra.mxu0 0.0
        %801 = vmatprep.subr.mxu0 0.0
        %802 = vmatpush1.msra.mxu0 0.0
        %803 = vmatprep.subr.mxu0 0.0
        %804 = vmatpush1.msra.mxu0 0.0
        %805 = vmatprep.subr.mxu0 0.0
        %806 = vmatpush1.msra.mxu0 0.0
        %807 = vmatprep.subr.mxu0 0.0
        %808 = vmatpush1.msra.mxu0 0.0
        %809 = vmatprep.subr.mxu0 0.0
        %810 = vmatpush1.msra.mxu0 0.0
        %811 = vmatprep.mubr.f32.mxu0 0.0
        %812 = vmatmul.mubr.f32.gmra.mrb[0].mxu0 %v697
        %v813 = vpop.f32.mrb[0].mxu0
        %v814 = vadd.f32 %v618, %v813
        %v815 = vpop.f32.mrb[0].mxu0
        %816 = vmatprep.mubr.f32.mxu0 0.0
        %817 = vmatmul.mubr.f32.gmra.mrb[0].mxu0 %v700
        %v818 = vpop.f32.mrb[0].mxu0
        %v819 = vadd.f32 %v623, %v818
        %v820 = vpop.f32.mrb[0].mxu0
        %821 = vmatprep.mubr.f32.mxu0 0.0
        %822 = vmatmul.mubr.f32.gmra.mrb[0].mxu0 %v703
        %v823 = vpop.f32.mrb[0].mxu0
        %v824 = vadd.f32 %v628, %v823
        %v825 = vpop.f32.mrb[0].mxu0
        %826 = vmatprep.mubr.f32.mxu0 0.0
        %827 = vmatmul.mubr.f32.gmra.mrb[0].mxu0 %v706
        %v828 = vpop.f32.mrb[0].mxu0
        %v829 = vadd.f32 %v633, %v828
        %v830 = vpop.f32.mrb[0].mxu0
        %831 = vmatprep.mubr.f32.mxu0 0.0
        %832 = vmatmul.mubr.f32.gmra.mrb[0].mxu0 %v709
        %v833 = vpop.f32.mrb[0].mxu0
        %v834 = vadd.f32 %v638, %v833
        %v835 = vpop.f32.mrb[0].mxu0
        %836 = vmatprep.mubr.f32.mxu0 0.0
        %837 = vmatmul.mubr.f32.gmra.mrb[0].mxu0 %v712
        %v838 = vpop.f32.mrb[0].mxu0
        %v839 = vadd.f32 %v643, %v838
        %v840 = vpop.f32.mrb[0].mxu0
        %841 = vmatprep.mubr.f32.mxu0 0.0
        %842 = vmatmul.mubr.f32.gmra.mrb[0].mxu0 %v715
        %v843 = vpop.f32.mrb[0].mxu0
        %v844 = vadd.f32 %v648, %v843
        %v845 = vpop.f32.mrb[0].mxu0
        %846 = vmatprep.mubr.f32.mxu0 0.0
        %847 = vmatmul.mubr.f32.gmra.mrb[0].mxu0 %v718
        %v848 = vpop.f32.mrb[0].mxu0
        %v849 = vadd.f32 %v653, %v848
        %v850 = vpop.f32.mrb[0].mxu0
        %851 = vmatprep.mubr.f32.mxu0 0.0
        %852 = vmatmul.mubr.f32.gmra.mrb[0].mxu0 %v721
        %v853 = vpop.f32.mrb[0].mxu0
        %v854 = vadd.f32 %v658, %v853
        %v855 = vpop.f32.mrb[0].mxu0
        %856 = vmatprep.mubr.f32.mxu0 0.0
        %857 = vmatmul.mubr.f32.gmra.mrb[0].mxu0 %v724
        %v858 = vpop.f32.mrb[0].mxu0
        %v859 = vadd.f32 %v663, %v858
        %v860 = vpop.f32.mrb[0].mxu0
        %861 = vmatprep.mubr.f32.mxu0 0.0
        %862 = vmatmul.mubr.f32.gmra.mrb[0].mxu0 %v727
        %v863 = vpop.f32.mrb[0].mxu0
        %v864 = vadd.f32 %v668, %v863
        %v865 = vpop.f32.mrb[0].mxu0
        %866 = vmatprep.mubr.f32.mxu0 0.0
        %867 = vmatmul.mubr.f32.gmra.mrb[0].mxu0 %v730
        %v868 = vpop.f32.mrb[0].mxu0
        %v869 = vadd.f32 %v673, %v868
        %v870 = vpop.f32.mrb[0].mxu0
        %871 = vmatprep.mubr.f32.mxu0 0.0
        %872 = vmatmul.mubr.f32.gmra.mrb[0].mxu0 %v733
        %v873 = vpop.f32.mrb[0].mxu0
        %v874 = vadd.f32 %v678, %v873
        %v875 = vpop.f32.mrb[0].mxu0
        %876 = vmatprep.mubr.f32.mxu0 0.0
        %877 = vmatmul.mubr.f32.gmra.mrb[0].mxu0 %v736
        %v878 = vpop.f32.mrb[0].mxu0
        %v879 = vadd.f32 %v683, %v878
        %v880 = vpop.f32.mrb[0].mxu0
        %881 = vmatprep.mubr.f32.mxu0 0.0
        %882 = vmatmul.mubr.f32.gmra.mrb[0].mxu0 %v739
        %v883 = vpop.f32.mrb[0].mxu0
        %v884 = vadd.f32 %v688, %v883
        %v885 = vpop.f32.mrb[0].mxu0
        %886 = vmatprep.mubr.f32.mxu0 0.0
        %887 = vmatmul.mubr.f32.gmra.mrb[0].mxu0 %v742
        %v888 = vpop.f32.mrb[0].mxu0
        %v889 = vadd.f32 %v693, %v888
        %v890 = vpop.f32.mrb[0].mxu0
        %891 = vdwg.mxu0
        %v892 = vld [vmem:[%s5] sm:$0x1]
        %v894 = vlaneseq
        %v895 = vshrl.u32 %v894, 7
        %v896 = vsub.s32 0, %v895
        %v897 = vrot.slane %v892, %v896
        %v899 = vadd.f32 %v814, %v897
        %v900 = vadd.f32 %v819, %v897
        %v901 = vadd.f32 %v824, %v897
        %v902 = vadd.f32 %v829, %v897
        %v903 = vadd.f32 %v834, %v897
        %v904 = vadd.f32 %v839, %v897
        %v905 = vadd.f32 %v844, %v897
        %v906 = vadd.f32 %v849, %v897
        %v907 = vadd.f32 %v854, %v897
        %v908 = vadd.f32 %v859, %v897
        %v909 = vadd.f32 %v864, %v897
        %v910 = vadd.f32 %v869, %v897
        %v911 = vadd.f32 %v874, %v897
        %v912 = vadd.f32 %v879, %v897
        %v913 = vadd.f32 %v884, %v897
        %v914 = vadd.f32 %v889, %v897
        %v915 = vld [vmem:[%s6] sm:$0xff]
        %v916 = vld [vmem:[%s6 + $0x8] sm:$0xff]
        %v917 = vld [vmem:[%s6 + $0x10] sm:$0xff]
        %v918 = vld [vmem:[%s6 + $0x18] sm:$0xff]
        %v919 = vld [vmem:[%s6 + $0x20] sm:$0xff]
        %v920 = vld [vmem:[%s6 + $0x28] sm:$0xff]
        %v921 = vld [vmem:[%s6 + $0x30] sm:$0xff]
        %v922 = vld [vmem:[%s6 + $0x38] sm:$0xff]
        %v923 = vld [vmem:[%s6 + $0x40] sm:$0xff]
        %v924 = vld [vmem:[%s6 + $0x48] sm:$0xff]
        %v925 = vld [vmem:[%s6 + $0x50] sm:$0xff]
        %v926 = vld [vmem:[%s6 + $0x58] sm:$0xff]
        %v927 = vld [vmem:[%s6 + $0x60] sm:$0xff]
        %v928 = vld [vmem:[%s6 + $0x68] sm:$0xff]
        %v929 = vld [vmem:[%s6 + $0x70] sm:$0xff]
        %v930 = vld [vmem:[%s6 + $0x78] sm:$0xff]
        %v931 = vld [vmem:[%s7] sm:$0x1]
        %v933 = vlaneseq
        %v934 = vshrl.u32 %v933, 7
        %v935 = vsub.s32 0, %v934
        %v936 = vrot.slane %v931, %v935
        %938 = vmatprep.subr.mxu0 0.0
        %939 = vmatpush1.msra.mxu0 %v915
        %940 = vmatprep.subr.mxu0 0.0
        %941 = vmatpush1.msra.mxu0 %v916
        %942 = vmatprep.subr.mxu0 0.0
        %943 = vmatpush1.msra.mxu0 %v917
        %944 = vmatprep.subr.mxu0 0.0
        %945 = vmatpush1.msra.mxu0 %v918
        %946 = vmatprep.subr.mxu0 0.0
        %947 = vmatpush1.msra.mxu0 %v919
        %948 = vmatprep.subr.mxu0 0.0
        %949 = vmatpush1.msra.mxu0 %v920
        %950 = vmatprep.subr.mxu0 0.0
        %951 = vmatpush1.msra.mxu0 %v921
        %952 = vmatprep.subr.mxu0 0.0
        %953 = vmatpush1.msra.mxu0 %v922
        %954 = vmatprep.subr.mxu0 0.0
        %955 = vmatpush1.msra.mxu0 %v923
        %956 = vmatprep.subr.mxu0 0.0
        %957 = vmatpush1.msra.mxu0 %v924
        %958 = vmatprep.subr.mxu0 0.0
        %959 = vmatpush1.msra.mxu0 %v925
        %960 = vmatprep.subr.mxu0 0.0
        %961 = vmatpush1.msra.mxu0 %v926
        %962 = vmatprep.subr.mxu0 0.0
        %963 = vmatpush1.msra.mxu0 %v927
        %964 = vmatprep.subr.mxu0 0.0
        %965 = vmatpush1.msra.mxu0 %v928
        %966 = vmatprep.subr.mxu0 0.0
        %967 = vmatpush1.msra.mxu0 %v929
        %968 = vmatprep.subr.mxu0 0.0
        %969 = vmatpush1.msra.mxu0 %v930
        %970 = vmatprep.subr.mxu0 0.0
        %971 = vmatpush1.msra.mxu0 0.0
        %972 = vmatprep.subr.mxu0 0.0
        %973 = vmatpush1.msra.mxu0 0.0
        %974 = vmatprep.subr.mxu0 0.0
        %975 = vmatpush1.msra.mxu0 0.0
        %976 = vmatprep.subr.mxu0 0.0
        %977 = vmatpush1.msra.mxu0 0.0
        %978 = vmatprep.subr.mxu0 0.0
        %979 = vmatpush1.msra.mxu0 0.0
        %980 = vmatprep.subr.mxu0 0.0
        %981 = vmatpush1.msra.mxu0 0.0
        %982 = vmatprep.subr.mxu0 0.0
        %983 = vmatpush1.msra.mxu0 0.0
        %984 = vmatprep.subr.mxu0 0.0
        %985 = vmatpush1.msra.mxu0 0.0
        %986 = vmatprep.subr.mxu0 0.0
        %987 = vmatpush1.msra.mxu0 0.0
        %988 = vmatprep.subr.mxu0 0.0
        %989 = vmatpush1.msra.mxu0 0.0
        %990 = vmatprep.subr.mxu0 0.0
        %991 = vmatpush1.msra.mxu0 0.0
        %992 = vmatprep.subr.mxu0 0.0
        %993 = vmatpush1.msra.mxu0 0.0
        %994 = vmatprep.subr.mxu0 0.0
        %995 = vmatpush1.msra.mxu0 0.0
        %996 = vmatprep.subr.mxu0 0.0
        %997 = vmatpush1.msra.mxu0 0.0
        %998 = vmatprep.subr.mxu0 0.0
        %999 = vmatpush1.msra.mxu0 0.0
        %1000 = vmatprep.subr.mxu0 0.0
        %1001 = vmatpush1.msra.mxu0 0.0
        %1002 = vmatprep.mubr.f32.mxu0 0.0
        %1003 = vmatmul.mubr.f32.gmra.mrb[0].mxu0 %v899
        %v1004 = vpop.f32.mrb[0].mxu0
        %v1005 = vadd.f32 %v936, %v1004
        %v1006 = vpop.f32.mrb[0].mxu0
        %1007 = vmatprep.mubr.f32.mxu0 0.0
        %1008 = vmatmul.mubr.f32.gmra.mrb[0].mxu0 %v900
        %v1009 = vpop.f32.mrb[0].mxu0
        %v1010 = vadd.f32 %v936, %v1009
        %v1011 = vpop.f32.mrb[0].mxu0
        %1012 = vmatprep.mubr.f32.mxu0 0.0
        %1013 = vmatmul.mubr.f32.gmra.mrb[0].mxu0 %v901
        %v1014 = vpop.f32.mrb[0].mxu0
        %v1015 = vadd.f32 %v936, %v1014
        %v1016 = vpop.f32.mrb[0].mxu0
        %1017 = vmatprep.mubr.f32.mxu0 0.0
        %1018 = vmatmul.mubr.f32.gmra.mrb[0].mxu0 %v902
        %v1019 = vpop.f32.mrb[0].mxu0
        %v1020 = vadd.f32 %v936, %v1019
        %v1021 = vpop.f32.mrb[0].mxu0
        %1022 = vmatprep.mubr.f32.mxu0 0.0
        %1023 = vmatmul.mubr.f32.gmra.mrb[0].mxu0 %v903
        %v1024 = vpop.f32.mrb[0].mxu0
        %v1025 = vadd.f32 %v936, %v1024
        %v1026 = vpop.f32.mrb[0].mxu0
        %1027 = vmatprep.mubr.f32.mxu0 0.0
        %1028 = vmatmul.mubr.f32.gmra.mrb[0].mxu0 %v904
        %v1029 = vpop.f32.mrb[0].mxu0
        %v1030 = vadd.f32 %v936, %v1029
        %v1031 = vpop.f32.mrb[0].mxu0
        %1032 = vmatprep.mubr.f32.mxu0 0.0
        %1033 = vmatmul.mubr.f32.gmra.mrb[0].mxu0 %v905
        %v1034 = vpop.f32.mrb[0].mxu0
        %v1035 = vadd.f32 %v936, %v1034
        %v1036 = vpop.f32.mrb[0].mxu0
        %1037 = vmatprep.mubr.f32.mxu0 0.0
        %1038 = vmatmul.mubr.f32.gmra.mrb[0].mxu0 %v906
        %v1039 = vpop.f32.mrb[0].mxu0
        %v1040 = vadd.f32 %v936, %v1039
        %v1041 = vpop.f32.mrb[0].mxu0
        %1042 = vmatprep.mubr.f32.mxu0 0.0
        %1043 = vmatmul.mubr.f32.gmra.mrb[0].mxu0 %v907
        %v1044 = vpop.f32.mrb[0].mxu0
        %v1045 = vadd.f32 %v936, %v1044
        %v1046 = vpop.f32.mrb[0].mxu0
        %1047 = vmatprep.mubr.f32.mxu0 0.0
        %1048 = vmatmul.mubr.f32.gmra.mrb[0].mxu0 %v908
        %v1049 = vpop.f32.mrb[0].mxu0
        %v1050 = vadd.f32 %v936, %v1049
        %v1051 = vpop.f32.mrb[0].mxu0
        %1052 = vmatprep.mubr.f32.mxu0 0.0
        %1053 = vmatmul.mubr.f32.gmra.mrb[0].mxu0 %v909
        %v1054 = vpop.f32.mrb[0].mxu0
        %v1055 = vadd.f32 %v936, %v1054
        %v1056 = vpop.f32.mrb[0].mxu0
        %1057 = vmatprep.mubr.f32.mxu0 0.0
        %1058 = vmatmul.mubr.f32.gmra.mrb[0].mxu0 %v910
        %v1059 = vpop.f32.mrb[0].mxu0
        %v1060 = vadd.f32 %v936, %v1059
        %v1061 = vpop.f32.mrb[0].mxu0
        %1062 = vmatprep.mubr.f32.mxu0 0.0
        %1063 = vmatmul.mubr.f32.gmra.mrb[0].mxu0 %v911
        %v1064 = vpop.f32.mrb[0].mxu0
        %v1065 = vadd.f32 %v936, %v1064
        %v1066 = vpop.f32.mrb[0].mxu0
        %1067 = vmatprep.mubr.f32.mxu0 0.0
        %1068 = vmatmul.mubr.f32.gmra.mrb[0].mxu0 %v912
        %v1069 = vpop.f32.mrb[0].mxu0
        %v1070 = vadd.f32 %v936, %v1069
        %v1071 = vpop.f32.mrb[0].mxu0
        %1072 = vmatprep.mubr.f32.mxu0 0.0
        %1073 = vmatmul.mubr.f32.gmra.mrb[0].mxu0 %v913
        %v1074 = vpop.f32.mrb[0].mxu0
        %v1075 = vadd.f32 %v936, %v1074
        %v1076 = vpop.f32.mrb[0].mxu0
        %1077 = vmatprep.mubr.f32.mxu0 0.0
        %1078 = vmatmul.mubr.f32.gmra.mrb[0].mxu0 %v914
        %v1079 = vpop.f32.mrb[0].mxu0
        %v1080 = vadd.f32 %v936, %v1079
        %v1081 = vpop.f32.mrb[0].mxu0
        %1082 = vdwg.mxu0
        %1083 = vst [vmem:[%s315] sm:$0xff] %v1005
        %1084 = vst [vmem:[%s315 + $0x10] sm:$0xff] %v1010
        %1085 = vst [vmem:[%s315 + $0x20] sm:$0xff] %v1015
        %1086 = vst [vmem:[%s315 + $0x30] sm:$0xff] %v1020
        %1087 = vst [vmem:[%s315 + $0x40] sm:$0xff] %v1025
        %1088 = vst [vmem:[%s315 + $0x50] sm:$0xff] %v1030
        %1089 = vst [vmem:[%s315 + $0x60] sm:$0xff] %v1035
        %1090 = vst [vmem:[%s315 + $0x70] sm:$0xff] %v1040
        %1091 = vst [vmem:[%s315 + $0x80] sm:$0xff] %v1045
        %1092 = vst [vmem:[%s315 + $0x90] sm:$0xff] %v1050
        %1093 = vst [vmem:[%s315 + $0xa0] sm:$0xff] %v1055
        %1094 = vst [vmem:[%s315 + $0xb0] sm:$0xff] %v1060
        %1095 = vst [vmem:[%s315 + $0xc0] sm:$0xff] %v1065
        %1096 = vst [vmem:[%s315 + $0xd0] sm:$0xff] %v1070
        %1097 = vst [vmem:[%s315 + $0xe0] sm:$0xff] %v1075
        %1098 = vst [vmem:[%s315 + $0xf0] sm:$0xff] %v1080
        %v1099 = vxor.u32 %v1005, 2147483648
        %v1100 = vxor.u32 %v1010, 2147483648
        %v1101 = vxor.u32 %v1015, 2147483648
        %v1102 = vxor.u32 %v1020, 2147483648
        %v1103 = vxor.u32 %v1025, 2147483648
        %v1104 = vxor.u32 %v1030, 2147483648
        %v1105 = vxor.u32 %v1035, 2147483648
        %v1106 = vxor.u32 %v1040, 2147483648
        %v1107 = vxor.u32 %v1045, 2147483648
        %v1108 = vxor.u32 %v1050, 2147483648
        %v1109 = vxor.u32 %v1055, 2147483648
        %v1110 = vxor.u32 %v1060, 2147483648
        %v1111 = vxor.u32 %v1065, 2147483648
        %v1112 = vxor.u32 %v1070, 2147483648
        %v1113 = vxor.u32 %v1075, 2147483648
        %v1114 = vxor.u32 %v1080, 2147483648
        %v1115 = vmul.f32 %v1099, 1.442695
        %v1116 = vpow.pop %v1115
        %v1117 = vmul.f32 %v1100, 1.442695
        %v1118 = vpow.pop %v1117
        %v1119 = vmul.f32 %v1101, 1.442695
        %v1120 = vpow.pop %v1119
        %v1121 = vmul.f32 %v1102, 1.442695
        %v1122 = vpow.pop %v1121
        %v1123 = vmul.f32 %v1103, 1.442695
        %v1124 = vpow.pop %v1123
        %v1125 = vmul.f32 %v1104, 1.442695
        %v1126 = vpow.pop %v1125
        %v1127 = vmul.f32 %v1105, 1.442695
        %v1128 = vpow.pop %v1127
        %v1129 = vmul.f32 %v1106, 1.442695
        %v1130 = vpow.pop %v1129
        %v1131 = vmul.f32 %v1107, 1.442695
        %v1132 = vpow.pop %v1131
        %v1133 = vmul.f32 %v1108, 1.442695
        %v1134 = vpow.pop %v1133
        %v1135 = vmul.f32 %v1109, 1.442695
        %v1136 = vpow.pop %v1135
        %v1137 = vmul.f32 %v1110, 1.442695
        %v1138 = vpow.pop %v1137
        %v1139 = vmul.f32 %v1111, 1.442695
        %v1140 = vpow.pop %v1139
        %v1141 = vmul.f32 %v1112, 1.442695
        %v1142 = vpow.pop %v1141
        %v1143 = vmul.f32 %v1113, 1.442695
        %v1144 = vpow.pop %v1143
        %v1145 = vmul.f32 %v1114, 1.442695
        %v1146 = vpow.pop %v1145
        %v1147 = vadd.f32 %v1116, 1.0
        %v1148 = vadd.f32 %v1118, 1.0
        %v1149 = vadd.f32 %v1120, 1.0
        %v1150 = vadd.f32 %v1122, 1.0
        %v1151 = vadd.f32 %v1124, 1.0
        %v1152 = vadd.f32 %v1126, 1.0
        %v1153 = vadd.f32 %v1128, 1.0
        %v1154 = vadd.f32 %v1130, 1.0
        %v1155 = vadd.f32 %v1132, 1.0
        %v1156 = vadd.f32 %v1134, 1.0
        %v1157 = vadd.f32 %v1136, 1.0
        %v1158 = vadd.f32 %v1138, 1.0
        %v1159 = vadd.f32 %v1140, 1.0
        %v1160 = vadd.f32 %v1142, 1.0
        %v1161 = vadd.f32 %v1144, 1.0
        %v1162 = vadd.f32 %v1146, 1.0
        %v1163 = vrcp.pop %v1147
        %v1164 = vmul.f32 1.0, %v1163
        %v1165 = vrcp.pop %v1148
        %v1166 = vmul.f32 1.0, %v1165
        %v1167 = vrcp.pop %v1149
        %v1168 = vmul.f32 1.0, %v1167
        %v1169 = vrcp.pop %v1150
        %v1170 = vmul.f32 1.0, %v1169
        %v1171 = vrcp.pop %v1151
        %v1172 = vmul.f32 1.0, %v1171
        %v1173 = vrcp.pop %v1152
        %v1174 = vmul.f32 1.0, %v1173
        %v1175 = vrcp.pop %v1153
        %v1176 = vmul.f32 1.0, %v1175
        %v1177 = vrcp.pop %v1154
        %v1178 = vmul.f32 1.0, %v1177
        %v1179 = vrcp.pop %v1155
        %v1180 = vmul.f32 1.0, %v1179
        %v1181 = vrcp.pop %v1156
        %v1182 = vmul.f32 1.0, %v1181
        %v1183 = vrcp.pop %v1157
        %v1184 = vmul.f32 1.0, %v1183
        %v1185 = vrcp.pop %v1158
        %v1186 = vmul.f32 1.0, %v1185
        %v1187 = vrcp.pop %v1159
        %v1188 = vmul.f32 1.0, %v1187
        %v1189 = vrcp.pop %v1160
        %v1190 = vmul.f32 1.0, %v1189
        %v1191 = vrcp.pop %v1161
        %v1192 = vmul.f32 1.0, %v1191
        %v1193 = vrcp.pop %v1162
        %v1194 = vmul.f32 1.0, %v1193
        %1195 = vst [vmem:[%s315 + $0x8] sm:$0xff] %v1164
        %1196 = vst [vmem:[%s315 + $0x18] sm:$0xff] %v1166
        %1197 = vst [vmem:[%s315 + $0x28] sm:$0xff] %v1168
        %1198 = vst [vmem:[%s315 + $0x38] sm:$0xff] %v1170
        %1199 = vst [vmem:[%s315 + $0x48] sm:$0xff] %v1172
        %1200 = vst [vmem:[%s315 + $0x58] sm:$0xff] %v1174
        %1201 = vst [vmem:[%s315 + $0x68] sm:$0xff] %v1176
        %1202 = vst [vmem:[%s315 + $0x78] sm:$0xff] %v1178
        %1203 = vst [vmem:[%s315 + $0x88] sm:$0xff] %v1180
        %1204 = vst [vmem:[%s315 + $0x98] sm:$0xff] %v1182
        %1205 = vst [vmem:[%s315 + $0xa8] sm:$0xff] %v1184
        %1206 = vst [vmem:[%s315 + $0xb8] sm:$0xff] %v1186
        %1207 = vst [vmem:[%s315 + $0xc8] sm:$0xff] %v1188
        %1208 = vst [vmem:[%s315 + $0xd8] sm:$0xff] %v1190
        %1209 = vst [vmem:[%s315 + $0xe8] sm:$0xff] %v1192
        %1210 = vst [vmem:[%s315 + $0xf8] sm:$0xff] %v1194
        %s1211 = sand.u32 %s208, 1
        %s1212 = scalar_lea.sflag [#allocation3], %s1211
        %s1213 = sand.u32 %s208, 1
        %s1214 = smul.addr %s1213, 256
        %s1215 = scalar_lea.vmem [#allocation2], %s1214
        // Predicated region
        $region53: #{tpu_custom_call.1} parent=51 // pred_check
          %p1216 = pneg %p218
        $region54: #{tpu_custom_call.1} parent=51 // pred_check_branch
          %1218 = sbr.rel (%p1216) target = $region56
        $region55: #{tpu_custom_call.1} parent=51 // pred_region
          %s1219 = smul.u32 16, %s22
          %s1221 = ssub.s32 4096, 4096
          %1222 = vsyncadd %s1212, %s1221
          %s1223 = smul.addr %s1219, 2
          %s1224 = smul.addr %s1223, 128
          %s1225 = scalar_lea.hbm %s8, %s1224
          %s1226 = sshll.u32 %s1215, 4
          %s1227 = int_to_ptr.vmem [resolvable:$true] %s1226
          %1232 = dma.vmem_to_hbm [thread:$0]  %s1227, 4096, %s1225, %s1212, 256, 256, 16
        $region56: #{tpu_custom_call.1} parent=51 // pred_fallthru
          _
      $region52: #{tpu_custom_call.1} parent=5 // pred_fallthru
        _
      %p1233 = scmp.le.s32.totalorder 2, %s17
      // Predicated region
      $region57: #{tpu_custom_call.1} parent=5 // pred_check
        %p1234 = pneg %p1233
      $region58: #{tpu_custom_call.1} parent=5 // pred_check_branch
        %1236 = sbr.rel (%p1234) target = $region60
      $region59: #{tpu_custom_call.1} parent=5 // pred_region
        %s1237 = ssub.s32 %s17, 2
        // Predicated region
        $region61: #{tpu_custom_call.1} parent=59 // pred_check
          %p1238 = pneg %p224
        $region62: #{tpu_custom_call.1} parent=59 // pred_check_branch
          %1240 = sbr.rel (%p1238) target = $region64
        $region63: #{tpu_custom_call.1} parent=59 // pred_region
          %s1241 = sand.u32 %s209, 1
          %s1242 = scalar_lea.sflag [#allocation3], %s1241
          %s1243 = sand.u32 %s209, 1
          %s1244 = smul.addr %s1243, 256
          %s1245 = scalar_lea.vmem [#allocation2], %s1244
          %1246 = dma.done %s1242, 4096
        $region64: #{tpu_custom_call.1} parent=59 // pred_fallthru
          _
      $region60: #{tpu_custom_call.1} parent=5 // pred_fallthru
        _
    $region6: #{tpu_custom_call.1} parent=1 // loop_footer
      %s21 = sadd.s32 1, %s17
    $region7: #{tpu_custom_call.1} parent=1 // loop_footer_branch
      %16 = sbr.rel target = $region3
    $region8: #{tpu_custom_call.1} parent=1 // loop_exit
      _
    %1247 = vsyncpa [#allocation3], 1
    %s1248 = scalar_lea.sflag [#allocation3], 1
    %1249 = vsyncpa %s1248, 1

</llo_original>
